<compile_context>
chip_gen: v5e
topology: v5e:2x2
jax: 0.10.0
libtpu: 0.0.40
codegen_flags: <defaults>
</compile_context>

<pallas_src>
from functools import partial

import numpy as np
import jax
import jax.numpy as jnp
from jax.experimental import pallas as pl
from jax.experimental.pallas import tpu as pltpu

# ----------------------- small, shape-consistent config -----------------------
ENC_INPUT_DIM = 16
ENC_CHANNELS  = [4, 1]           # last encoder channel must be 1 (z.view(B, codeDim))
ENC_KERNEL    = [4, 4]
ENC_STRIDE    = [2, 2]
ENC_PAD       = [1, 1]

CODE_DIM = 4                     # = final encoder length (16 -> 8 -> 4)
CODE_NUM = 8

DEC_INPUT_DIM = 4
DEC_CHANNELS  = [4, 1]           # last decoder channel must be 1 (output.view(B, L))
DEC_KERNEL    = [4, 4]
DEC_STRIDE    = [2, 2]
DEC_PAD       = [1, 1]           # decoder lengths: 4 -> 8 -> 16 == ENC_INPUT_DIM

SPK_SET = ["spkA", "spkB", "spkC"]
Y_DIM   = len(SPK_SET)
SPK_DICT = {s: i for i, s in enumerate(SPK_SET)}

BATCH   = 2
LANES   = 128                    # lane width
BIAS_LN = LANES - 1              # lane carrying the constant 1.0 (bias trick)
BIG     = 1e30                   # score for padding codebook lanes
N_W     = 7                      # number of (128,128) weight planes in the slab

# weight-slab plane indices (W_GATHER and W_GATHER@W_EMB live in the packed RHS)
W_E1, W_E2, W_SCORE, W_EMB, W_D1, W_D2, W_MU = range(N_W)


# --------------------------- Pallas kernel -----------------------------------
def vqvae_kernel(x_ref, y_ref, w_ref, wp_ref, out_ref):
    f32 = jnp.float32
    mt = x_ref.shape[0]
    lane = jax.lax.broadcasted_iota(jnp.int32, (mt, LANES), 1)
    bias_col = (lane == BIAS_LN).astype(f32)           # constant-1 bias lane

    # Off-critical-path: speaker one-hot / bias contribution to the decoder
    # input (no dependency on the encoder chain -> issued first).
    y_emb = jnp.dot(y_ref[...] + bias_col, w_ref[W_EMB], preferred_element_type=f32)

    # ---- encoder: Conv1d + ReLU stack (Toeplitz matmuls, biases folded) ----
    x = x_ref[...] + bias_col
    h = jnp.maximum(jnp.dot(x, w_ref[W_E1], preferred_element_type=f32), 0.0)
    z = jnp.maximum(jnp.dot(h, w_ref[W_E2], preferred_element_type=f32), 0.0)
    out_ref[0] = z                                      # z in lanes 0:CODE_DIM

    # ---- find_codebook: matmul-form score, first-index min ----
    # score_j = -z . c_j + 0.5*||c_j||^2  (argmin-equivalent to 0.5*||z-c_j||^2)
    scores = jnp.dot(z, w_ref[W_SCORE], preferred_element_type=f32)     # (mt,128)
    mins   = jnp.min(scores, axis=1, keepdims=True)
    cand   = jnp.where(scores <= mins, lane, LANES)
    first  = jnp.min(cand, axis=1, keepdims=True)       # first (lowest-index) min
    onehot = (lane == first).astype(f32)                # (mt,128)

    # One 256-wide MXU pass against [W_GATHER | W_GATHER@W_EMB]:
    #   lanes   0:128 -> code (one-hot gather of the codebook)
    #   lanes 128:256 -> code's contribution to the decoder input
    packed = jnp.dot(onehot, wp_ref[...], preferred_element_type=f32)   # (mt,256)
    out_ref[1] = packed[:, :LANES]                      # code in lanes 0:CODE_DIM
    d = packed[:, LANES:] + y_emb                       # spkEmb output (bias lane = 1)

    # ---- decoder: ConvTranspose1d + ReLU stack + outMu (biases folded) ----
    h = jnp.maximum(jnp.dot(d, w_ref[W_D1], preferred_element_type=f32), 0.0)
    h = jnp.maximum(jnp.dot(h, w_ref[W_D2], preferred_element_type=f32), 0.0)
    out_ref[2] = jnp.dot(h, w_ref[W_MU], preferred_element_type=f32)


# ----------------------- conv -> dense (Toeplitz) glue ------------------------
def conv1d_to_dense(w, b, Lin, stride, pad):
    """w: (Cout, Cin, K), b: (Cout,) -> M: (Cin*Lin, Cout*Lout), bflat: (Cout*Lout,)."""
    Cout, Cin, K = w.shape
    Lout = (Lin + 2 * pad - K) // stride + 1
    M = np.zeros((Cin * Lin, Cout * Lout), np.float32)
    for co in range(Cout):
        for ci in range(Cin):
            for t in range(Lout):
                for k in range(K):
                    l = t * stride + k - pad
                    if 0 <= l < Lin:
                        M[ci * Lin + l, co * Lout + t] += w[co, ci, k]
    return M, np.repeat(b, Lout).astype(np.float32), Lout


def convT1d_to_dense(w, b, Lin, stride, pad):
    """w: (Cin, Cout, K), b: (Cout,) -> M: (Cin*Lin, Cout*Lout), bflat: (Cout*Lout,)."""
    Cin, Cout, K = w.shape
    Lout = (Lin - 1) * stride - 2 * pad + K
    M = np.zeros((Cin * Lin, Cout * Lout), np.float32)
    for ci in range(Cin):
        for j in range(Lin):
            for co in range(Cout):
                for k in range(K):
                    t = j * stride + k - pad
                    if 0 <= t < Lout:
                        M[ci * Lin + j, co * Lout + t] += w[ci, co, k]
    return M, np.repeat(b, Lout).astype(np.float32), Lout


def _pad_weight(M, b, keep_bias_lane=True):
    """Embed (K,N) weight + bias row into a (128,128) plane; lane 127 carries a
    pass-through 1.0 so the next layer can reuse the bias trick."""
    K, N = M.shape
    W = np.zeros((LANES, LANES), np.float32)
    W[:K, :N] = M
    W[BIAS_LN, :N] = b
    if keep_bias_lane:
        W[BIAS_LN, BIAS_LN] = 1.0
    return W


# ----------------------------- parameter init ---------------------------------
def init_params(key):
    ks = list(jax.random.split(key, 16))

    def u(shape, lo, hi):
        return np.asarray(jax.random.uniform(ks.pop(), shape, minval=lo, maxval=hi), np.float32)

    raw = {}
    # encoder convs: weight (Cout, Cin, K), bias (Cout,)
    in_ch = 1
    raw["enc_w"], raw["enc_b"] = [], []
    for i in range(2):
        raw["enc_w"].append(u((ENC_CHANNELS[i], in_ch, ENC_KERNEL[i]), -0.3, 0.3))
        raw["enc_b"].append(u((ENC_CHANNELS[i],), -0.1, 0.1))
        in_ch = ENC_CHANNELS[i]
    # codebook (module uses U(0,1e-5); scaled up for a meaningful nearest-code test)
    raw["codebook"] = u((CODE_NUM, CODE_DIM), 0.0, 0.1)
    # spkEmb: weight (DEC_INPUT_DIM, CODE_DIM + Y_DIM), bias zeros
    raw["emb_w"] = u((DEC_INPUT_DIM, CODE_DIM + Y_DIM), 0.0, 0.1)
    raw["emb_b"] = np.zeros((DEC_INPUT_DIM,), np.float32)
    # decoder conv-transposes: weight (Cin, Cout, K), bias (Cout,)
    in_ch = 1
    raw["dec_w"], raw["dec_b"] = [], []
    for i in range(2):
        raw["dec_w"].append(u((in_ch, DEC_CHANNELS[i], DEC_KERNEL[i]), -0.3, 0.3))
        raw["dec_b"].append(u((DEC_CHANNELS[i],), -0.1, 0.1))
        in_ch = DEC_CHANNELS[i]
    # outMu: weight (ENC_INPUT_DIM, ENC_INPUT_DIM), bias zeros
    raw["mu_w"] = u((ENC_INPUT_DIM, ENC_INPUT_DIM), 0.0, 0.1)
    raw["mu_b"] = np.zeros((ENC_INPUT_DIM,), np.float32)

    # --- lower convs to dense Toeplitz matrices ---
    e1M, e1b, L1  = conv1d_to_dense(raw["enc_w"][0], raw["enc_b"][0], ENC_INPUT_DIM,
                                    ENC_STRIDE[0], ENC_PAD[0])
    e2M, e2b, L2  = conv1d_to_dense(raw["enc_w"][1], raw["enc_b"][1], L1,
                                    ENC_STRIDE[1], ENC_PAD[1])
    assert ENC_CHANNELS[1] * L2 == CODE_DIM
    d1M, d1b, Ld1 = convT1d_to_dense(raw["dec_w"][0], raw["dec_b"][0], DEC_INPUT_DIM,
                                     DEC_STRIDE[0], DEC_PAD[0])
    d2M, d2b, Ld2 = convT1d_to_dense(raw["dec_w"][1], raw["dec_b"][1], Ld1,
                                     DEC_STRIDE[1], DEC_PAD[1])
    assert DEC_CHANNELS[1] * Ld2 == ENC_INPUT_DIM

    # --- build the (N_W, 128, 128) padded weight slab ---
    cb = raw["codebook"]                                   # (CODE_NUM, CODE_DIM)
    slab = np.zeros((N_W, LANES, LANES), np.float32)

    slab[W_E1] = _pad_weight(e1M, e1b)
    slab[W_E2] = _pad_weight(e2M, e2b)

    # VQ score matrix: rows 0:CODE_DIM = -cb.T, bias row = 0.5*||cb||^2, padding BIG
    Ws = np.zeros((LANES, LANES), np.float32)
    Ws[:CODE_DIM, :CODE_NUM] = -cb.T
    Ws[BIAS_LN, :CODE_NUM]   = 0.5 * (cb * cb).sum(axis=1)
    Ws[BIAS_LN, CODE_NUM:]   = BIG
    slab[W_SCORE] = Ws

    # spkEmb (matmul on the speaker one-hot + bias, code part handled via W_GE)
    We = np.zeros((LANES, LANES), np.float32)
    We[:CODE_DIM, :DEC_INPUT_DIM]                 = raw["emb_w"][:, :CODE_DIM].T
    We[CODE_DIM:CODE_DIM + Y_DIM, :DEC_INPUT_DIM] = raw["emb_w"][:, CODE_DIM:].T
    We[BIAS_LN, :DEC_INPUT_DIM]                   = raw["emb_b"]
    We[BIAS_LN, BIAS_LN]                          = 1.0
    slab[W_EMB] = We

    slab[W_D1] = _pad_weight(d1M, d1b)
    slab[W_D2] = _pad_weight(d2M, d2b)
    slab[W_MU] = _pad_weight(raw["mu_w"].T, raw["mu_b"], keep_bias_lane=False)

    # --- packed (128,256) RHS: [W_GATHER | W_GATHER @ W_EMB] ---
    # One MXU pass of the argmin one-hot yields both `code` and the decoder
    # input contribution (removes one hop from the serial matmul chain).
    Wg = np.zeros((LANES, LANES), np.float32)
    Wg[:CODE_NUM, :CODE_DIM] = cb
    wpack = np.concatenate([Wg, Wg @ We], axis=1)          # (128, 256)

    return jnp.asarray(slab), jnp.asarray(wpack), raw


# ------------------------------- wrapper ---------------------------------------
@partial(jax.jit, static_argnames=("block_m",))
def vqvae_forward(x, spk_idxs, wslab, wpack, block_m=256):
    B = x.shape[0]
    m_up  = -(-B // 8) * 8                        # batch padded to sublane multiple
    bm    = max(8, (min(block_m, m_up) // 8) * 8) # rows per grid step (multiple of 8)
    m_pad = -(-B // bm) * bm                      # total padded rows
    grid  = (m_pad // bm,)

    # Fused activation construction: one pad for x, one one_hot+pad for speakers.
    # The constant-1 bias lane is generated inside the kernel.
    xa = jnp.pad(x.astype(jnp.float32),
                 ((0, m_pad - B), (0, LANES - ENC_INPUT_DIM)))
    ya = jnp.pad(jax.nn.one_hot(spk_idxs + CODE_DIM, LANES, dtype=jnp.float32),
                 ((0, m_pad - B), (0, 0)))

    cost = pl.CostEstimate(
        flops=2 * m_pad * LANES * LANES * 9,      # 7 chain matmuls + y_emb + 256-wide pack
        transcendentals=0,
        bytes_accessed=4 * (5 * m_pad * LANES + N_W * LANES * LANES + 2 * LANES * LANES),
    )

    packed = pl.pallas_call(
        vqvae_kernel,
        out_shape=jax.ShapeDtypeStruct((3, m_pad, LANES), jnp.float32),
        grid_spec=pltpu.PrefetchScalarGridSpec(
            num_scalar_prefetch=0,
            grid=grid,
            in_specs=[
                pl.BlockSpec((bm, LANES), lambda m: (m, 0)),             # x rows
                pl.BlockSpec((bm, LANES), lambda m: (m, 0)),             # speaker rows
                pl.BlockSpec((N_W, LANES, LANES), lambda m: (0, 0, 0)),  # weight slab: resident
                pl.BlockSpec((LANES, 2 * LANES), lambda m: (0, 0)),      # packed RHS: resident
            ],
            out_specs=pl.BlockSpec((3, bm, LANES), lambda m: (0, m, 0)),
        ),
        compiler_params=pltpu.CompilerParams(dimension_semantics=("parallel",)),
        cost_estimate=cost,
    )(xa, ya, wslab, wpack)

    z    = packed[0, :B, :CODE_DIM]
    code = packed[1, :B, :CODE_DIM]
    out  = packed[2, :B, :ENC_INPUT_DIM]
    return z, code, out


# --------------------------- numpy reference (check) ----------------------------
def np_conv1d(x, w, b, stride, pad):
    B, Cin, Lin = x.shape
    Cout, _, K = w.shape
    Lout = (Lin + 2 * pad - K) // stride + 1
    xp = np.zeros((B, Cin, Lin + 2 * pad), np.float32)
    xp[:, :, pad:pad + Lin] = x
    out = np.zeros((B, Cout, Lout), np.float32)
    for t in range(Lout):
        seg = xp[:, :, t * stride:t * stride + K]
        out[:, :, t] = np.einsum("bck,ock->bo", seg, w) + b
    return out


def np_convT1d(x, w, b, stride, pad):
    B, Cin, Lin = x.shape
    _, Cout, K = w.shape
    Lout = (Lin - 1) * stride - 2 * pad + K
    full = np.zeros((B, Cout, Lout + 2 * pad), np.float32)
    for j in range(Lin):
        full[:, :, j * stride:j * stride + K] += np.einsum("bc,cok->bok", x[:, :, j], w)
    return full[:, :, pad:pad + Lout] + b[None, :, None]


def np_forward(x, spk_idxs, raw):
    B = x.shape[0]
    h = x.reshape(B, 1, -1).astype(np.float32)
    for i in range(2):
        h = np.maximum(np_conv1d(h, raw["enc_w"][i], raw["enc_b"][i], ENC_STRIDE[i], ENC_PAD[i]), 0.0)
    z = h.reshape(B, -1)
    cb = raw["codebook"]
    dists = 0.5 * ((z[:, None, :] - cb[None, :, :]) ** 2).sum(-1)
    code = cb[dists.argmin(1)]
    y = np.eye(Y_DIM, dtype=np.float32)[np.asarray(spk_idxs)]
    emb_in = np.concatenate([code, y], axis=1)
    dec_in = emb_in @ raw["emb_w"].T + raw["emb_b"]
    h = dec_in.reshape(B, 1, -1)
    for i in range(2):
        h = np.maximum(np_convT1d(h, raw["dec_w"][i], raw["dec_b"][i], DEC_STRIDE[i], DEC_PAD[i]), 0.0)
    out = h @ raw["mu_w"].T + raw["mu_b"]
    return z, code, out.reshape(B, -1)


# ---------------------------------- main ----------------------------------------
if __name__ == "__main__":
    key = jax.random.PRNGKey(0)
    pkey, xkey, xkey2 = jax.random.split(key, 3)
    wslab, wpack, raw = init_params(pkey)

    # --- primary check: batch=2 (grid of 1 step) ---
    x = jax.random.normal(xkey, (BATCH, ENC_INPUT_DIM), dtype=jnp.float32)
    spk_ids = ["spkB", "spkC"]
    spk_idxs = jnp.asarray([SPK_DICT[s] for s in spk_ids], dtype=jnp.int32)

    z, code, out = vqvae_forward(x, spk_idxs, wslab, wpack)
    jax.block_until_ready((z, code, out))

    assert z.shape == (BATCH, CODE_DIM)
    assert code.shape == (BATCH, CODE_DIM)
    assert out.shape == (BATCH, ENC_INPUT_DIM)

    z_ref, code_ref, out_ref = np_forward(np.asarray(x), np.asarray(spk_idxs), raw)
    np.testing.assert_allclose(np.asarray(z), z_ref, rtol=1e-3, atol=1e-4)
    np.testing.assert_allclose(np.asarray(code), code_ref, rtol=1e-3, atol=1e-4)
    np.testing.assert_allclose(np.asarray(out), out_ref, rtol=1e-3, atol=1e-4)

    # --- multi-step grid check: batch=48 with 16-row tiles (grid of 3 steps,
    #     weights stay VMEM-resident across steps, batch axis "parallel") ---
    xb = jax.random.normal(xkey2, (48, ENC_INPUT_DIM), dtype=jnp.float32)
    sb = jnp.asarray(np.arange(48) % Y_DIM, dtype=jnp.int32)
    zb, cbq, ob = vqvae_forward(xb, sb, wslab, wpack, block_m=16)
    jax.block_until_ready((zb, cbq, ob))

    zb_ref, cb_ref, ob_ref = np_forward(np.asarray(xb), np.asarray(sb), raw)
    np.testing.assert_allclose(np.asarray(zb), zb_ref, rtol=1e-3, atol=1e-4)
    np.testing.assert_allclose(np.asarray(cbq), cb_ref, rtol=1e-3, atol=1e-4)
    np.testing.assert_allclose(np.asarray(ob), ob_ref, rtol=1e-3, atol=1e-4)

    print("KERNEL_OK")
</pallas_src>

<mosaic_0001>
module attributes {stable_mosaic.version = 11 : i64} {
  func.func @vqvae_kernel(%arg0: i32, %arg1: memref<8x128xf32, #tpu.memory_space<vmem>>, %arg2: memref<8x128xf32, #tpu.memory_space<vmem>>, %arg3: memref<7x128x128xf32, #tpu.memory_space<vmem>>, %arg4: memref<128x256xf32, #tpu.memory_space<vmem>>, %arg5: memref<3x8x128xf32, #tpu.memory_space<vmem>>) attributes {dimension_semantics = [#tpu.dimension_semantics<parallel>], iteration_bounds = array<i64: 1>, scalar_prefetch = 0 : i64, scratch_operands = 0 : i64, tpu.core_type = #tpu.core_type<tc>, window_params = [{transform_indices = @transform_0, window_bounds = array<i64: 8, 128>}, {transform_indices = @transform_1, window_bounds = array<i64: 8, 128>}, {pipeline_mode = #tpu.pipeline_mode<synchronous>, transform_indices = @transform_2, window_bounds = array<i64: 7, 128, 128>}, {pipeline_mode = #tpu.pipeline_mode<synchronous>, transform_indices = @transform_3, window_bounds = array<i64: 128, 256>}, {transform_indices = @transform_4, window_bounds = array<i64: 3, 8, 128>}]} {
    %0 = tpu.iota {dimensions = array<i32: 1>} : vector<8x128xi32>
    %c127_i32 = arith.constant 127 : i32
    %1 = vector.broadcast %c127_i32 : i32 to vector<8x128xi32>
    %2 = arith.cmpi eq, %0, %1 : vector<8x128xi32>
    %3 = arith.extui %2 : vector<8x128xi1> to vector<8x128xi32>
    %4 = arith.sitofp %3 : vector<8x128xi32> to vector<8x128xf32>
    %c0 = arith.constant 0 : index
    %c0_0 = arith.constant 0 : index
    %5 = vector.load %arg2[%c0, %c0_0] : memref<8x128xf32, #tpu.memory_space<vmem>>, vector<8x128xf32>
    %6 = arith.addf %5, %4 : vector<8x128xf32>
    %c3 = arith.constant 3 : index
    %c0_1 = arith.constant 0 : index
    %c0_2 = arith.constant 0 : index
    %7 = vector.load %arg3[%c3, %c0_1, %c0_2] : memref<7x128x128xf32, #tpu.memory_space<vmem>>, vector<1x128x128xf32>
    %8 = vector.shape_cast %7 : vector<1x128x128xf32> to vector<128x128xf32>
    %cst = arith.constant dense<0.000000e+00> : vector<8x128xf32>
    %9 = tpu.matmul %6, %8, %cst {dimension_numbers = #tpu.dot_dimension_numbers<[1], [0], [0], [1], [0, 0, 1, 1], [], []>} : vector<8x128xf32>, vector<128x128xf32>, vector<8x128xf32> -> vector<8x128xf32>
    %c0_3 = arith.constant 0 : index
    %c0_4 = arith.constant 0 : index
    %10 = vector.load %arg1[%c0_3, %c0_4] : memref<8x128xf32, #tpu.memory_space<vmem>>, vector<8x128xf32>
    %11 = arith.addf %10, %4 : vector<8x128xf32>
    %c0_5 = arith.constant 0 : index
    %c0_6 = arith.constant 0 : index
    %c0_7 = arith.constant 0 : index
    %12 = vector.load %arg3[%c0_5, %c0_6, %c0_7] : memref<7x128x128xf32, #tpu.memory_space<vmem>>, vector<1x128x128xf32>
    %13 = vector.shape_cast %12 : vector<1x128x128xf32> to vector<128x128xf32>
    %cst_8 = arith.constant dense<0.000000e+00> : vector<8x128xf32>
    %14 = tpu.matmul %11, %13, %cst_8 {dimension_numbers = #tpu.dot_dimension_numbers<[1], [0], [0], [1], [0, 0, 1, 1], [], []>} : vector<8x128xf32>, vector<128x128xf32>, vector<8x128xf32> -> vector<8x128xf32>
    %cst_9 = arith.constant 0.000000e+00 : f32
    %15 = vector.broadcast %cst_9 : f32 to vector<8x128xf32>
    %16 = arith.maximumf %14, %15 : vector<8x128xf32>
    %c1 = arith.constant 1 : index
    %c0_10 = arith.constant 0 : index
    %c0_11 = arith.constant 0 : index
    %17 = vector.load %arg3[%c1, %c0_10, %c0_11] : memref<7x128x128xf32, #tpu.memory_space<vmem>>, vector<1x128x128xf32>
    %18 = vector.shape_cast %17 : vector<1x128x128xf32> to vector<128x128xf32>
    %cst_12 = arith.constant dense<0.000000e+00> : vector<8x128xf32>
    %19 = tpu.matmul %16, %18, %cst_12 {dimension_numbers = #tpu.dot_dimension_numbers<[1], [0], [0], [1], [0, 0, 1, 1], [], []>} : vector<8x128xf32>, vector<128x128xf32>, vector<8x128xf32> -> vector<8x128xf32>
    %cst_13 = arith.constant 0.000000e+00 : f32
    %20 = vector.broadcast %cst_13 : f32 to vector<8x128xf32>
    %21 = arith.maximumf %19, %20 : vector<8x128xf32>
    %c0_14 = arith.constant 0 : index
    %c0_15 = arith.constant 0 : index
    %c0_16 = arith.constant 0 : index
    %22 = vector.load %arg5[%c0_14, %c0_15, %c0_16] : memref<3x8x128xf32, #tpu.memory_space<vmem>>, vector<1x8x128xf32>
    %23 = vector.shape_cast %22 : vector<1x8x128xf32> to vector<8x128xf32>
    %24 = vector.shape_cast %21 : vector<8x128xf32> to vector<1x8x128xf32>
    tpu.vector_store %arg5[%c0_14, %c0_15, %c0_16], %24 {strides = array<i32>} : memref<3x8x128xf32, #tpu.memory_space<vmem>>, vector<1x8x128xf32>,
    %c2 = arith.constant 2 : index
    %c0_17 = arith.constant 0 : index
    %c0_18 = arith.constant 0 : index
    %25 = vector.load %arg3[%c2, %c0_17, %c0_18] : memref<7x128x128xf32, #tpu.memory_space<vmem>>, vector<1x128x128xf32>
    %26 = vector.shape_cast %25 : vector<1x128x128xf32> to vector<128x128xf32>
    %cst_19 = arith.constant dense<0.000000e+00> : vector<8x128xf32>
    %27 = tpu.matmul %21, %26, %cst_19 {dimension_numbers = #tpu.dot_dimension_numbers<[1], [0], [0], [1], [0, 0, 1, 1], [], []>} : vector<8x128xf32>, vector<128x128xf32>, vector<8x128xf32> -> vector<8x128xf32>
    %cst_20 = arith.constant dense<0x7F800000> : vector<8xf32>
    %28 = vector.multi_reduction <minimumf>, %27, %cst_20 [1] : vector<8x128xf32> to vector<8xf32>
    %29 = vector.shape_cast %28 : vector<8xf32> to vector<8x1xf32>
    %30 = vector.broadcast %29 : vector<8x1xf32> to vector<8x128xf32>
    %31 = arith.cmpf ole, %27, %30 : vector<8x128xf32>
    %c128_i32 = arith.constant 128 : i32
    %32 = vector.broadcast %c128_i32 : i32 to vector<8x128xi32>
    %33 = arith.select %31, %0, %32 : vector<8x128xi1>, vector<8x128xi32>
    %cst_21 = arith.constant dense<2147483647> : vector<8xi32>
    %34 = vector.multi_reduction <minsi>, %33, %cst_21 [1] : vector<8x128xi32> to vector<8xi32>
    %35 = vector.shape_cast %34 : vector<8xi32> to vector<8x1xi32>
    %36 = vector.broadcast %35 : vector<8x1xi32> to vector<8x128xi32>
    %37 = arith.cmpi eq, %0, %36 : vector<8x128xi32>
    %38 = arith.extui %37 : vector<8x128xi1> to vector<8x128xi32>
    %39 = arith.sitofp %38 : vector<8x128xi32> to vector<8x128xf32>
    %c0_22 = arith.constant 0 : index
    %c0_23 = arith.constant 0 : index
    %40 = vector.load %arg4[%c0_22, %c0_23] : memref<128x256xf32, #tpu.memory_space<vmem>>, vector<128x256xf32>
    %cst_24 = arith.constant dense<0.000000e+00> : vector<8x256xf32>
    %41 = tpu.matmul %39, %40, %cst_24 {dimension_numbers = #tpu.dot_dimension_numbers<[1], [0], [0], [1], [0, 0, 1, 1], [], []>} : vector<8x128xf32>, vector<128x256xf32>, vector<8x256xf32> -> vector<8x256xf32>
    %42 = vector.extract_strided_slice %41 {offsets = [0, 0], sizes = [8, 128], strides = [1, 1]} : vector<8x256xf32> to vector<8x128xf32>
    %c1_25 = arith.constant 1 : index
    %c0_26 = arith.constant 0 : index
    %c0_27 = arith.constant 0 : index
    %43 = vector.load %arg5[%c1_25, %c0_26, %c0_27] : memref<3x8x128xf32, #tpu.memory_space<vmem>>, vector<1x8x128xf32>
    %44 = vector.shape_cast %43 : vector<1x8x128xf32> to vector<8x128xf32>
    %45 = vector.shape_cast %42 : vector<8x128xf32> to vector<1x8x128xf32>
    tpu.vector_store %arg5[%c1_25, %c0_26, %c0_27], %45 {strides = array<i32>} : memref<3x8x128xf32, #tpu.memory_space<vmem>>, vector<1x8x128xf32>,
    %46 = vector.extract_strided_slice %41 {offsets = [0, 128], sizes = [8, 128], strides = [1, 1]} : vector<8x256xf32> to vector<8x128xf32>
    %47 = arith.addf %46, %9 : vector<8x128xf32>
    %c4 = arith.constant 4 : index
    %c0_28 = arith.constant 0 : index
    %c0_29 = arith.constant 0 : index
    %48 = vector.load %arg3[%c4, %c0_28, %c0_29] : memref<7x128x128xf32, #tpu.memory_space<vmem>>, vector<1x128x128xf32>
    %49 = vector.shape_cast %48 : vector<1x128x128xf32> to vector<128x128xf32>
    %cst_30 = arith.constant dense<0.000000e+00> : vector<8x128xf32>
    %50 = tpu.matmul %47, %49, %cst_30 {dimension_numbers = #tpu.dot_dimension_numbers<[1], [0], [0], [1], [0, 0, 1, 1], [], []>} : vector<8x128xf32>, vector<128x128xf32>, vector<8x128xf32> -> vector<8x128xf32>
    %cst_31 = arith.constant 0.000000e+00 : f32
    %51 = vector.broadcast %cst_31 : f32 to vector<8x128xf32>
    %52 = arith.maximumf %50, %51 : vector<8x128xf32>
    %c5 = arith.constant 5 : index
    %c0_32 = arith.constant 0 : index
    %c0_33 = arith.constant 0 : index
    %53 = vector.load %arg3[%c5, %c0_32, %c0_33] : memref<7x128x128xf32, #tpu.memory_space<vmem>>, vector<1x128x128xf32>
    %54 = vector.shape_cast %53 : vector<1x128x128xf32> to vector<128x128xf32>
    %cst_34 = arith.constant dense<0.000000e+00> : vector<8x128xf32>
    %55 = tpu.matmul %52, %54, %cst_34 {dimension_numbers = #tpu.dot_dimension_numbers<[1], [0], [0], [1], [0, 0, 1, 1], [], []>} : vector<8x128xf32>, vector<128x128xf32>, vector<8x128xf32> -> vector<8x128xf32>
    %cst_35 = arith.constant 0.000000e+00 : f32
    %56 = vector.broadcast %cst_35 : f32 to vector<8x128xf32>
    %57 = arith.maximumf %55, %56 : vector<8x128xf32>
    %c6 = arith.constant 6 : index
    %c0_36 = arith.constant 0 : index
    %c0_37 = arith.constant 0 : index
    %58 = vector.load %arg3[%c6, %c0_36, %c0_37] : memref<7x128x128xf32, #tpu.memory_space<vmem>>, vector<1x128x128xf32>
    %59 = vector.shape_cast %58 : vector<1x128x128xf32> to vector<128x128xf32>
    %cst_38 = arith.constant dense<0.000000e+00> : vector<8x128xf32>
    %60 = tpu.matmul %57, %59, %cst_38 {dimension_numbers = #tpu.dot_dimension_numbers<[1], [0], [0], [1], [0, 0, 1, 1], [], []>} : vector<8x128xf32>, vector<128x128xf32>, vector<8x128xf32> -> vector<8x128xf32>
    %c2_39 = arith.constant 2 : index
    %c0_40 = arith.constant 0 : index
    %c0_41 = arith.constant 0 : index
    %61 = vector.load %arg5[%c2_39, %c0_40, %c0_41] : memref<3x8x128xf32, #tpu.memory_space<vmem>>, vector<1x8x128xf32>
    %62 = vector.shape_cast %61 : vector<1x8x128xf32> to vector<8x128xf32>
    %63 = vector.shape_cast %60 : vector<8x128xf32> to vector<1x8x128xf32>
    tpu.vector_store %arg5[%c2_39, %c0_40, %c0_41], %63 {strides = array<i32>} : memref<3x8x128xf32, #tpu.memory_space<vmem>>, vector<1x8x128xf32>,
    return
  }
  func.func @transform_0(%arg0: i32) -> (i32, i32) {
    %c0_i32 = arith.constant 0 : i32
    %c0_i32_0 = arith.constant 0 : i32
    return %arg0, %c0_i32 : i32, i32
  }
  func.func @transform_1(%arg0: i32) -> (i32, i32) {
    %c0_i32 = arith.constant 0 : i32
    %c0_i32_0 = arith.constant 0 : i32
    return %arg0, %c0_i32 : i32, i32
  }
  func.func @transform_2(%arg0: i32) -> (i32, i32, i32) {
    %c0_i32 = arith.constant 0 : i32
    %c0_i32_0 = arith.constant 0 : i32
    %c0_i32_1 = arith.constant 0 : i32
    %c0_i32_2 = arith.constant 0 : i32
    return %c0_i32, %c0_i32_0, %c0_i32_1 : i32, i32, i32
  }
  func.func @transform_3(%arg0: i32) -> (i32, i32) {
    %c0_i32 = arith.constant 0 : i32
    %c0_i32_0 = arith.constant 0 : i32
    %c0_i32_1 = arith.constant 0 : i32
    return %c0_i32, %c0_i32_0 : i32, i32
  }
  func.func @transform_4(%arg0: i32) -> (i32, i32, i32) {
    %c0_i32 = arith.constant 0 : i32
    %c0_i32_0 = arith.constant 0 : i32
    %c0_i32_1 = arith.constant 0 : i32
    return %c0_i32, %arg0, %c0_i32_0 : i32, i32, i32
  }
}

</mosaic_0001>

<llo_original>
// kernel: vqvae_forward.1
$region0: #{vqvae_forward.1}
  #allocation0 [shape = 'u32[]', space=smem, size = 0x4, offset = 0x4, fixed_abs, tag = 'smem constant byte address 0x4 - core index']
  #allocation1 [shape = 'u32[72,128]{1,0:T(1,128)}', space=vmem, size = 0x9000, scoped, tag = 'internal scratch']
  %s0 = inlined_call_operand.vmem [shape: f32[8,128], index: 0, kind: input, shape index: {}]
  %s1 = inlined_call_operand.vmem [shape: f32[8,128], index: 1, kind: input, shape index: {}]
  %s2 = inlined_call_operand.hbm [shape: f32[7,128,128], index: 2, kind: input, shape index: {}]
  %s3 = inlined_call_operand.hbm [shape: f32[128,256], index: 3, kind: input, shape index: {}]
  %s4 = inlined_call_operand.vmem [shape: f32[3,8,128], index: 4, kind: output, shape index: {}]
  %s5 = sld [smem:[#allocation0]]
  $region34: #{vqvae_forward.1} parent=0
    _
  %s7 = ssub.s32 1, %s5
  %s8 = scalar_select 0, %s7, %s5
  $region1: #{vqvae_forward.1} parent=0
    #allocation2 [shape = 'u8[458752]{0}', space=vmem, size = 0x70000, scoped, tag = 'input window, operand 2, single buffered']
    #allocation3 [shape = 's32[1]{0}', space=sflag, size = 0x4, scoped, tag = 'scoped memory for vqvae_forward.1']
    #allocation4 [shape = 'u8[131072]{0}', space=vmem, size = 0x20000, scoped, tag = 'input window, operand 3, single buffered']
    #allocation5 [shape = 's32[1]{0}', space=sflag, size = 0x4, scoped, tag = 'scoped memory for vqvae_forward.1']
    %9 = vsyncpa [#allocation3], 0
    %10 = vsyncpa [#allocation5], 0
    // Predicated region
    $region2: #{vqvae_forward.1} parent=1 // pred_check
      _
    $region3: #{vqvae_forward.1} parent=1 // pred_check_branch
      %12 = sbr.rel (0) target = $region5
    $region4: #{vqvae_forward.1} parent=1 // pred_region
      _
    $region5: #{vqvae_forward.1} parent=1 // pred_fallthru
      _
    // Predicated region
    $region6: #{vqvae_forward.1} parent=1 // pred_check
      _
    $region7: #{vqvae_forward.1} parent=1 // pred_check_branch
      %14 = sbr.rel (0) target = $region9
    $region8: #{vqvae_forward.1} parent=1 // pred_region
      _
    $region9: #{vqvae_forward.1} parent=1 // pred_fallthru
      _
    // Predicated region
    $region10: #{vqvae_forward.1} parent=1 // pred_check
      _
    $region11: #{vqvae_forward.1} parent=1 // pred_check_branch
      %16 = sbr.rel (0) target = $region13
    $region12: #{vqvae_forward.1} parent=1 // pred_region
      %18 = vsyncadd [#allocation3], 0
      %s19 = sshll.u32 %s2, 4
      %s20 = int_to_ptr.hbm [resolvable:$true] %s19
      %s21 = sshll.u32 [#allocation2], 4
      %s22 = int_to_ptr.vmem [resolvable:$true] %s21
      %27 = dma.hbm_to_vmem [thread:$0]  %s20, 14336, %s22, [#allocation3], 128, 128, 8
    $region13: #{vqvae_forward.1} parent=1 // pred_fallthru
      _
    // Predicated region
    $region14: #{vqvae_forward.1} parent=1 // pred_check
      _
    $region15: #{vqvae_forward.1} parent=1 // pred_check_branch
      %29 = sbr.rel (0) target = $region17
    $region16: #{vqvae_forward.1} parent=1 // pred_region
      %31 = vsyncadd [#allocation5], 0
      %s32 = sshll.u32 %s3, 4
      %s33 = int_to_ptr.hbm [resolvable:$true] %s32
      %s34 = sshll.u32 [#allocation4], 4
      %s35 = int_to_ptr.vmem [resolvable:$true] %s34
      %40 = dma.hbm_to_vmem [thread:$0]  %s33, 4096, %s35, [#allocation5], 256, 256, 16
    $region17: #{vqvae_forward.1} parent=1 // pred_fallthru
      _
    // Predicated region
    $region18: #{vqvae_forward.1} parent=1 // pred_check
      _
    $region19: #{vqvae_forward.1} parent=1 // pred_check_branch
      %42 = sbr.rel (0) target = $region21
    $region20: #{vqvae_forward.1} parent=1 // pred_region
      %44 = dma.done [#allocation3], 14336
    $region21: #{vqvae_forward.1} parent=1 // pred_fallthru
      _
    // Predicated region
    $region22: #{vqvae_forward.1} parent=1 // pred_check
      _
    $region23: #{vqvae_forward.1} parent=1 // pred_check_branch
      %46 = sbr.rel (0) target = $region25
    $region24: #{vqvae_forward.1} parent=1 // pred_region
      %48 = dma.done [#allocation5], 4096
    $region25: #{vqvae_forward.1} parent=1 // pred_fallthru
      _
    %v49 = vlaneseq
    %v50 = vand.u32 %v49, 127
    %vm51 = vcmp.eq.s32.totalorder %v50, 127
    %v52 = vsel %vm51, 1, 0
    %v53 = vcvt.s32.f32 %v52
    %v54 = vld [vmem:[%s1] sm:$0xff]
    %v55 = vadd.f32 %v54, %v53
    %s56 = scalar_lea.vmem [#allocation2], 384
    %v57 = vld [vmem:[%s56] sm:$0xff]
    %v58 = vld [vmem:[%s56 + $0x8] sm:$0xff]
    %v59 = vld [vmem:[%s56 + $0x10] sm:$0xff]
    %v60 = vld [vmem:[%s56 + $0x18] sm:$0xff]
    %v61 = vld [vmem:[%s56 + $0x20] sm:$0xff]
    %v62 = vld [vmem:[%s56 + $0x28] sm:$0xff]
    %v63 = vld [vmem:[%s56 + $0x30] sm:$0xff]
    %v64 = vld [vmem:[%s56 + $0x38] sm:$0xff]
    %v65 = vld [vmem:[%s56 + $0x40] sm:$0xff]
    %v66 = vld [vmem:[%s56 + $0x48] sm:$0xff]
    %v67 = vld [vmem:[%s56 + $0x50] sm:$0xff]
    %v68 = vld [vmem:[%s56 + $0x58] sm:$0xff]
    %v69 = vld [vmem:[%s56 + $0x60] sm:$0xff]
    %v70 = vld [vmem:[%s56 + $0x68] sm:$0xff]
    %v71 = vld [vmem:[%s56 + $0x70] sm:$0xff]
    %v72 = vld [vmem:[%s56 + $0x78] sm:$0xff]
    %73 = vmatpush.msra.mxu0 %v72
    %74 = vmatpush.msra.mxu0 %v71
    %75 = vmatpush.msra.mxu0 %v70
    %76 = vmatpush.msra.mxu0 %v69
    %77 = vmatpush.msra.mxu0 %v68
    %78 = vmatpush.msra.mxu0 %v67
    %79 = vmatpush.msra.mxu0 %v66
    %80 = vmatpush.msra.mxu0 %v65
    %81 = vmatpush.msra.mxu0 %v64
    %82 = vmatpush.msra.mxu0 %v63
    %83 = vmatpush.msra.mxu0 %v62
    %84 = vmatpush.msra.mxu0 %v61
    %85 = vmatpush.msra.mxu0 %v60
    %86 = vmatpush.msra.mxu0 %v59
    %87 = vmatpush.msra.mxu0 %v58
    %88 = vmatpush.msra.mxu0 %v57
    %89 = vmatmul.f32.gmra.mxu0 %v55
    %v90 = vpop.f32.mrf.mxu0
    %v91 = vadd.f32 0.0, %v90
    %92 = vdwg.mxu0
    %v93 = vld [vmem:[%s0] sm:$0xff]
    %v94 = vadd.f32 %v93, %v53
    %v95 = vld [vmem:[#allocation2] sm:$0xff]
    %v96 = vld [vmem:[#allocation2 + $0x8] sm:$0xff]
    %v97 = vld [vmem:[#allocation2 + $0x10] sm:$0xff]
    %v98 = vld [vmem:[#allocation2 + $0x18] sm:$0xff]
    %v99 = vld [vmem:[#allocation2 + $0x20] sm:$0xff]
    %v100 = vld [vmem:[#allocation2 + $0x28] sm:$0xff]
    %v101 = vld [vmem:[#allocation2 + $0x30] sm:$0xff]
    %v102 = vld [vmem:[#allocation2 + $0x38] sm:$0xff]
    %v103 = vld [vmem:[#allocation2 + $0x40] sm:$0xff]
    %v104 = vld [vmem:[#allocation2 + $0x48] sm:$0xff]
    %v105 = vld [vmem:[#allocation2 + $0x50] sm:$0xff]
    %v106 = vld [vmem:[#allocation2 + $0x58] sm:$0xff]
    %v107 = vld [vmem:[#allocation2 + $0x60] sm:$0xff]
    %v108 = vld [vmem:[#allocation2 + $0x68] sm:$0xff]
    %v109 = vld [vmem:[#allocation2 + $0x70] sm:$0xff]
    %v110 = vld [vmem:[#allocation2 + $0x78] sm:$0xff]
    %111 = vmatpush.msra.mxu0 %v110
    %112 = vmatpush.msra.mxu0 %v109
    %113 = vmatpush.msra.mxu0 %v108
    %114 = vmatpush.msra.mxu0 %v107
    %115 = vmatpush.msra.mxu0 %v106
    %116 = vmatpush.msra.mxu0 %v105
    %117 = vmatpush.msra.mxu0 %v104
    %118 = vmatpush.msra.mxu0 %v103
    %119 = vmatpush.msra.mxu0 %v102
    %120 = vmatpush.msra.mxu0 %v101
    %121 = vmatpush.msra.mxu0 %v100
    %122 = vmatpush.msra.mxu0 %v99
    %123 = vmatpush.msra.mxu0 %v98
    %124 = vmatpush.msra.mxu0 %v97
    %125 = vmatpush.msra.mxu0 %v96
    %126 = vmatpush.msra.mxu0 %v95
    %127 = vmatmul.f32.gmra.mxu0 %v94
    %v128 = vpop.f32.mrf.mxu0
    %v129 = vadd.f32 0.0, %v128
    %130 = vdwg.mxu0
    %v131 = vmax.f32 %v129, 0.0
    %s132 = scalar_lea.vmem [#allocation2], 128
    %v133 = vld [vmem:[%s132] sm:$0xff]
    %v134 = vld [vmem:[%s132 + $0x8] sm:$0xff]
    %v135 = vld [vmem:[%s132 + $0x10] sm:$0xff]
    %v136 = vld [vmem:[%s132 + $0x18] sm:$0xff]
    %v137 = vld [vmem:[%s132 + $0x20] sm:$0xff]
    %v138 = vld [vmem:[%s132 + $0x28] sm:$0xff]
    %v139 = vld [vmem:[%s132 + $0x30] sm:$0xff]
    %v140 = vld [vmem:[%s132 + $0x38] sm:$0xff]
    %v141 = vld [vmem:[%s132 + $0x40] sm:$0xff]
    %v142 = vld [vmem:[%s132 + $0x48] sm:$0xff]
    %v143 = vld [vmem:[%s132 + $0x50] sm:$0xff]
    %v144 = vld [vmem:[%s132 + $0x58] sm:$0xff]
    %v145 = vld [vmem:[%s132 + $0x60] sm:$0xff]
    %v146 = vld [vmem:[%s132 + $0x68] sm:$0xff]
    %v147 = vld [vmem:[%s132 + $0x70] sm:$0xff]
    %v148 = vld [vmem:[%s132 + $0x78] sm:$0xff]
    %149 = vmatpush.msra.mxu0 %v148
    %150 = vmatpush.msra.mxu0 %v147
    %151 = vmatpush.msra.mxu0 %v146
    %152 = vmatpush.msra.mxu0 %v145
    %153 = vmatpush.msra.mxu0 %v144
    %154 = vmatpush.msra.mxu0 %v143
    %155 = vmatpush.msra.mxu0 %v142
    %156 = vmatpush.msra.mxu0 %v141
    %157 = vmatpush.msra.mxu0 %v140
    %158 = vmatpush.msra.mxu0 %v139
    %159 = vmatpush.msra.mxu0 %v138
    %160 = vmatpush.msra.mxu0 %v137
    %161 = vmatpush.msra.mxu0 %v136
    %162 = vmatpush.msra.mxu0 %v135
    %163 = vmatpush.msra.mxu0 %v134
    %164 = vmatpush.msra.mxu0 %v133
    %165 = vmatmul.f32.gmra.mxu0 %v131
    %v166 = vpop.f32.mrf.mxu0
    %v167 = vadd.f32 0.0, %v166
    %168 = vdwg.mxu0
    %v169 = vmax.f32 %v167, 0.0
    %170 = vst [vmem:[%s4] sm:$0xff] %v169
    %s171 = scalar_lea.vmem [#allocation2], 256
    %v172 = vld [vmem:[%s171] sm:$0xff]
    %v173 = vld [vmem:[%s171 + $0x8] sm:$0xff]
    %v174 = vld [vmem:[%s171 + $0x10] sm:$0xff]
    %v175 = vld [vmem:[%s171 + $0x18] sm:$0xff]
    %v176 = vld [vmem:[%s171 + $0x20] sm:$0xff]
    %v177 = vld [vmem:[%s171 + $0x28] sm:$0xff]
    %v178 = vld [vmem:[%s171 + $0x30] sm:$0xff]
    %v179 = vld [vmem:[%s171 + $0x38] sm:$0xff]
    %v180 = vld [vmem:[%s171 + $0x40] sm:$0xff]
    %v181 = vld [vmem:[%s171 + $0x48] sm:$0xff]
    %v182 = vld [vmem:[%s171 + $0x50] sm:$0xff]
    %v183 = vld [vmem:[%s171 + $0x58] sm:$0xff]
    %v184 = vld [vmem:[%s171 + $0x60] sm:$0xff]
    %v185 = vld [vmem:[%s171 + $0x68] sm:$0xff]
    %v186 = vld [vmem:[%s171 + $0x70] sm:$0xff]
    %v187 = vld [vmem:[%s171 + $0x78] sm:$0xff]
    %188 = vmatpush.msra.mxu0 %v187
    %189 = vmatpush.msra.mxu0 %v186
    %190 = vmatpush.msra.mxu0 %v185
    %191 = vmatpush.msra.mxu0 %v184
    %192 = vmatpush.msra.mxu0 %v183
    %193 = vmatpush.msra.mxu0 %v182
    %194 = vmatpush.msra.mxu0 %v181
    %195 = vmatpush.msra.mxu0 %v180
    %196 = vmatpush.msra.mxu0 %v179
    %197 = vmatpush.msra.mxu0 %v178
    %198 = vmatpush.msra.mxu0 %v177
    %199 = vmatpush.msra.mxu0 %v176
    %200 = vmatpush.msra.mxu0 %v175
    %201 = vmatpush.msra.mxu0 %v174
    %202 = vmatpush.msra.mxu0 %v173
    %203 = vmatpush.msra.mxu0 %v172
    %204 = vmatmul.f32.gmra.mxu0 %v169
    %v205 = vpop.f32.mrf.mxu0
    %v206 = vadd.f32 0.0, %v205
    %207 = vdwg.mxu0
    %208 = vmin.xlane.f32.xlu0 %v206
    %v209 = vpop.xlane.xlu0 %208
    %vm210 = vcmp.le.f32.partialorder %v206, %v209
    %v211 = vsel %vm210, %v50, 128
    %v212 = vand.u32 %v211, 65535
    %v213 = vshra.s32 %v211, 16
    %v214 = vcvt.s32.f32 %v212
    %v215 = vcvt.s32.f32 %v213
    %216 = vmin.xlane.f32.xlu0 %v215
    %v217 = vpop.xlane.xlu0 %216
    %vm218 = vcmp.eq.f32.partialorder %v215, %v217
    %v219 = vsel %vm218, %v214, inf
    %220 = vmin.xlane.f32.xlu0 %v219
    %v221 = vpop.xlane.xlu0 %220
    %v222 = vcvt.f32.s32 %v221
    %v223 = vcvt.f32.s32 %v217
    %v224 = vshll.u32 %v223, 16
    %v225 = vadd.s32 %v224, %v222
    %vm226 = vcmp.eq.s32.totalorder %v50, %v225
    %v227 = vsel %vm226, 1, 0
    %v228 = vcvt.s32.f32 %v227
    %v229 = vld [vmem:[#allocation4] sm:$0xff]
    %v230 = vld [vmem:[#allocation4 + $0x8] sm:$0xff]
    %v231 = vld [vmem:[#allocation4 + $0x10] sm:$0xff]
    %v232 = vld [vmem:[#allocation4 + $0x18] sm:$0xff]
    %v233 = vld [vmem:[#allocation4 + $0x20] sm:$0xff]
    %v234 = vld [vmem:[#allocation4 + $0x28] sm:$0xff]
    %v235 = vld [vmem:[#allocation4 + $0x30] sm:$0xff]
    %v236 = vld [vmem:[#allocation4 + $0x38] sm:$0xff]
    %v237 = vld [vmem:[#allocation4 + $0x40] sm:$0xff]
    %v238 = vld [vmem:[#allocation4 + $0x48] sm:$0xff]
    %v239 = vld [vmem:[#allocation4 + $0x50] sm:$0xff]
    %v240 = vld [vmem:[#allocation4 + $0x58] sm:$0xff]
    %v241 = vld [vmem:[#allocation4 + $0x60] sm:$0xff]
    %v242 = vld [vmem:[#allocation4 + $0x68] sm:$0xff]
    %v243 = vld [vmem:[#allocation4 + $0x70] sm:$0xff]
    %v244 = vld [vmem:[#allocation4 + $0x78] sm:$0xff]
    %v245 = vld [vmem:[#allocation4 + $0x80] sm:$0xff]
    %v246 = vld [vmem:[#allocation4 + $0x88] sm:$0xff]
    %v247 = vld [vmem:[#allocation4 + $0x90] sm:$0xff]
    %v248 = vld [vmem:[#allocation4 + $0x98] sm:$0xff]
    %v249 = vld [vmem:[#allocation4 + $0xa0] sm:$0xff]
    %v250 = vld [vmem:[#allocation4 + $0xa8] sm:$0xff]
    %v251 = vld [vmem:[#allocation4 + $0xb0] sm:$0xff]
    %v252 = vld [vmem:[#allocation4 + $0xb8] sm:$0xff]
    %v253 = vld [vmem:[#allocation4 + $0xc0] sm:$0xff]
    %v254 = vld [vmem:[#allocation4 + $0xc8] sm:$0xff]
    %v255 = vld [vmem:[#allocation4 + $0xd0] sm:$0xff]
    %v256 = vld [vmem:[#allocation4 + $0xd8] sm:$0xff]
    %v257 = vld [vmem:[#allocation4 + $0xe0] sm:$0xff]
    %v258 = vld [vmem:[#allocation4 + $0xe8] sm:$0xff]
    %v259 = vld [vmem:[#allocation4 + $0xf0] sm:$0xff]
    %v260 = vld [vmem:[#allocation4 + $0xf8] sm:$0xff]
    %261 = vmatpush.msra.mxu0 %v259
    %262 = vmatpush.msra.mxu0 %v257
    %263 = vmatpush.msra.mxu0 %v255
    %264 = vmatpush.msra.mxu0 %v253
    %265 = vmatpush.msra.mxu0 %v251
    %266 = vmatpush.msra.mxu0 %v249
    %267 = vmatpush.msra.mxu0 %v247
    %268 = vmatpush.msra.mxu0 %v245
    %269 = vmatpush.msra.mxu0 %v243
    %270 = vmatpush.msra.mxu0 %v241
    %271 = vmatpush.msra.mxu0 %v239
    %272 = vmatpush.msra.mxu0 %v237
    %273 = vmatpush.msra.mxu0 %v235
    %274 = vmatpush.msra.mxu0 %v233
    %275 = vmatpush.msra.mxu0 %v231
    %276 = vmatpush.msra.mxu0 %v229
    %277 = vmatmul.f32.gmra.mxu0 %v228
    %v278 = vpop.f32.mrf.mxu0
    %v279 = vadd.f32 0.0, %v278
    %280 = vdwg.mxu0
    %281 = vmatpush.msra.mxu0 %v260
    %282 = vmatpush.msra.mxu0 %v258
    %283 = vmatpush.msra.mxu0 %v256
    %284 = vmatpush.msra.mxu0 %v254
    %285 = vmatpush.msra.mxu0 %v252
    %286 = vmatpush.msra.mxu0 %v250
    %287 = vmatpush.msra.mxu0 %v248
    %288 = vmatpush.msra.mxu0 %v246
    %289 = vmatpush.msra.mxu0 %v244
    %290 = vmatpush.msra.mxu0 %v242
    %291 = vmatpush.msra.mxu0 %v240
    %292 = vmatpush.msra.mxu0 %v238
    %293 = vmatpush.msra.mxu0 %v236
    %294 = vmatpush.msra.mxu0 %v234
    %295 = vmatpush.msra.mxu0 %v232
    %296 = vmatpush.msra.mxu0 %v230
    %297 = vmatmul.f32.gmra.mxu0 %v228
    %v298 = vpop.f32.mrf.mxu0
    %v299 = vadd.f32 0.0, %v298
    %300 = vdwg.mxu0
    %s301 = scalar_lea.vmem %s4, 8
    %302 = vst [vmem:[%s301] sm:$0xff] %v279
    %v303 = vadd.f32 %v299, %v91
    %s304 = scalar_lea.vmem [#allocation2], 512
    %v305 = vld [vmem:[%s304] sm:$0xff]
    %v306 = vld [vmem:[%s304 + $0x8] sm:$0xff]
    %v307 = vld [vmem:[%s304 + $0x10] sm:$0xff]
    %v308 = vld [vmem:[%s304 + $0x18] sm:$0xff]
    %v309 = vld [vmem:[%s304 + $0x20] sm:$0xff]
    %v310 = vld [vmem:[%s304 + $0x28] sm:$0xff]
    %v311 = vld [vmem:[%s304 + $0x30] sm:$0xff]
    %v312 = vld [vmem:[%s304 + $0x38] sm:$0xff]
    %v313 = vld [vmem:[%s304 + $0x40] sm:$0xff]
    %v314 = vld [vmem:[%s304 + $0x48] sm:$0xff]
    %v315 = vld [vmem:[%s304 + $0x50] sm:$0xff]
    %v316 = vld [vmem:[%s304 + $0x58] sm:$0xff]
    %v317 = vld [vmem:[%s304 + $0x60] sm:$0xff]
    %v318 = vld [vmem:[%s304 + $0x68] sm:$0xff]
    %v319 = vld [vmem:[%s304 + $0x70] sm:$0xff]
    %v320 = vld [vmem:[%s304 + $0x78] sm:$0xff]
    %321 = vmatpush.msra.mxu0 %v320
    %322 = vmatpush.msra.mxu0 %v319
    %323 = vmatpush.msra.mxu0 %v318
    %324 = vmatpush.msra.mxu0 %v317
    %325 = vmatpush.msra.mxu0 %v316
    %326 = vmatpush.msra.mxu0 %v315
    %327 = vmatpush.msra.mxu0 %v314
    %328 = vmatpush.msra.mxu0 %v313
    %329 = vmatpush.msra.mxu0 %v312
    %330 = vmatpush.msra.mxu0 %v311
    %331 = vmatpush.msra.mxu0 %v310
    %332 = vmatpush.msra.mxu0 %v309
    %333 = vmatpush.msra.mxu0 %v308
    %334 = vmatpush.msra.mxu0 %v307
    %335 = vmatpush.msra.mxu0 %v306
    %336 = vmatpush.msra.mxu0 %v305
    %337 = vmatmul.f32.gmra.mxu0 %v303
    %v338 = vpop.f32.mrf.mxu0
    %v339 = vadd.f32 0.0, %v338
    %340 = vdwg.mxu0
    %v341 = vmax.f32 %v339, 0.0
    %s342 = scalar_lea.vmem [#allocation2], 640
    %v343 = vld [vmem:[%s342] sm:$0xff]
    %v344 = vld [vmem:[%s342 + $0x8] sm:$0xff]
    %v345 = vld [vmem:[%s342 + $0x10] sm:$0xff]
    %v346 = vld [vmem:[%s342 + $0x18] sm:$0xff]
    %v347 = vld [vmem:[%s342 + $0x20] sm:$0xff]
    %v348 = vld [vmem:[%s342 + $0x28] sm:$0xff]
    %v349 = vld [vmem:[%s342 + $0x30] sm:$0xff]
    %v350 = vld [vmem:[%s342 + $0x38] sm:$0xff]
    %v351 = vld [vmem:[%s342 + $0x40] sm:$0xff]
    %v352 = vld [vmem:[%s342 + $0x48] sm:$0xff]
    %v353 = vld [vmem:[%s342 + $0x50] sm:$0xff]
    %v354 = vld [vmem:[%s342 + $0x58] sm:$0xff]
    %v355 = vld [vmem:[%s342 + $0x60] sm:$0xff]
    %v356 = vld [vmem:[%s342 + $0x68] sm:$0xff]
    %v357 = vld [vmem:[%s342 + $0x70] sm:$0xff]
    %v358 = vld [vmem:[%s342 + $0x78] sm:$0xff]
    %359 = vmatpush.msra.mxu0 %v358
    %360 = vmatpush.msra.mxu0 %v357
    %361 = vmatpush.msra.mxu0 %v356
    %362 = vmatpush.msra.mxu0 %v355
    %363 = vmatpush.msra.mxu0 %v354
    %364 = vmatpush.msra.mxu0 %v353
    %365 = vmatpush.msra.mxu0 %v352
    %366 = vmatpush.msra.mxu0 %v351
    %367 = vmatpush.msra.mxu0 %v350
    %368 = vmatpush.msra.mxu0 %v349
    %369 = vmatpush.msra.mxu0 %v348
    %370 = vmatpush.msra.mxu0 %v347
    %371 = vmatpush.msra.mxu0 %v346
    %372 = vmatpush.msra.mxu0 %v345
    %373 = vmatpush.msra.mxu0 %v344
    %374 = vmatpush.msra.mxu0 %v343
    %375 = vmatmul.f32.gmra.mxu0 %v341
    %v376 = vpop.f32.mrf.mxu0
    %v377 = vadd.f32 0.0, %v376
    %378 = vdwg.mxu0
    %v379 = vmax.f32 %v377, 0.0
    %s380 = scalar_lea.vmem [#allocation2], 768
    %v381 = vld [vmem:[%s380] sm:$0xff]
    %v382 = vld [vmem:[%s380 + $0x8] sm:$0xff]
    %v383 = vld [vmem:[%s380 + $0x10] sm:$0xff]
    %v384 = vld [vmem:[%s380 + $0x18] sm:$0xff]
    %v385 = vld [vmem:[%s380 + $0x20] sm:$0xff]
    %v386 = vld [vmem:[%s380 + $0x28] sm:$0xff]
    %v387 = vld [vmem:[%s380 + $0x30] sm:$0xff]
    %v388 = vld [vmem:[%s380 + $0x38] sm:$0xff]
    %v389 = vld [vmem:[%s380 + $0x40] sm:$0xff]
    %v390 = vld [vmem:[%s380 + $0x48] sm:$0xff]
    %v391 = vld [vmem:[%s380 + $0x50] sm:$0xff]
    %v392 = vld [vmem:[%s380 + $0x58] sm:$0xff]
    %v393 = vld [vmem:[%s380 + $0x60] sm:$0xff]
    %v394 = vld [vmem:[%s380 + $0x68] sm:$0xff]
    %v395 = vld [vmem:[%s380 + $0x70] sm:$0xff]
    %v396 = vld [vmem:[%s380 + $0x78] sm:$0xff]
    %397 = vmatpush.msra.mxu0 %v396
    %398 = vmatpush.msra.mxu0 %v395
    %399 = vmatpush.msra.mxu0 %v394
    %400 = vmatpush.msra.mxu0 %v393
    %401 = vmatpush.msra.mxu0 %v392
    %402 = vmatpush.msra.mxu0 %v391
    %403 = vmatpush.msra.mxu0 %v390
    %404 = vmatpush.msra.mxu0 %v389
    %405 = vmatpush.msra.mxu0 %v388
    %406 = vmatpush.msra.mxu0 %v387
    %407 = vmatpush.msra.mxu0 %v386
    %408 = vmatpush.msra.mxu0 %v385
    %409 = vmatpush.msra.mxu0 %v384
    %410 = vmatpush.msra.mxu0 %v383
    %411 = vmatpush.msra.mxu0 %v382
    %412 = vmatpush.msra.mxu0 %v381
    %413 = vmatmul.f32.gmra.mxu0 %v379
    %v414 = vpop.f32.mrf.mxu0
    %v415 = vadd.f32 0.0, %v414
    %416 = vdwg.mxu0
    %s417 = scalar_lea.vmem %s4, 16
    %418 = vst [vmem:[%s417] sm:$0xff] %v415
    // Predicated region
    $region26: #{vqvae_forward.1} parent=1 // pred_check
      _
    $region27: #{vqvae_forward.1} parent=1 // pred_check_branch
      %420 = sbr.rel (0) target = $region29
    $region28: #{vqvae_forward.1} parent=1 // pred_region
      _
    $region29: #{vqvae_forward.1} parent=1 // pred_fallthru
      _
    // Predicated region
    $region30: #{vqvae_forward.1} parent=1 // pred_check
      _
    $region31: #{vqvae_forward.1} parent=1 // pred_check_branch
      %422 = sbr.rel (0) target = $region33
    $region32: #{vqvae_forward.1} parent=1 // pred_region
      _
    $region33: #{vqvae_forward.1} parent=1 // pred_fallthru
      _
    %423 = vsyncpa [#allocation3], 1
    %424 = vsyncpa [#allocation5], 1

</llo_original>
